<compile_context>
chip_gen: v5e
topology: v5e:2x2
jax: 0.10.0
libtpu: 0.0.40
codegen_flags: <defaults>
</compile_context>

<pallas_src>
import functools

import jax
import jax.numpy as jnp
from jax.experimental import pallas as pl
from jax.experimental.pallas import tpu as pltpu


def _round_up(a, b):
    return (a + b - 1) // b * b


# ------------------------------- kernels -------------------------------------


def _resnet_fc_kernel_skipproj(x_ref, w0s_ref, b0_ref, w1_ref, b1_ref, o_ref, *, split):
    """size_in != size_out: fc_0 and fc_s fused into one matmul on the shared x.

    `split` (padded size_inner) is a multiple of 128, so both static slices of the
    fused pre-activation start on a vreg lane boundary (no XLU relayout per tile).
    """
    # Cast to the compute dtype here (cheap VPU work hidden under the tile DMA)
    # instead of a separate wrapper-side astype pass over all of x in HBM.
    xc = x_ref[...].astype(w0s_ref.dtype)
    # One MXU push over the shared x: pre = x @ [W0_pad | Ws], f32 accumulation.
    pre = jnp.dot(xc, w0s_ref[...], preferred_element_type=jnp.float32)
    h = jnp.maximum(pre[:, :split] + b0_ref[...], 0.0)
    x_s = pre[:, split:]
    h = h.astype(w1_ref.dtype)
    h = jnp.maximum(
        jnp.dot(h, w1_ref[...], preferred_element_type=jnp.float32) + b1_ref[...], 0.0)
    o_ref[...] = (x_s + h).astype(o_ref.dtype)


def _resnet_fc_kernel_identity(x_ref, w0_ref, b0_ref, w1_ref, b1_ref, o_ref):
    """size_in == size_out: skip path is identity (residual kept in full precision)."""
    x = x_ref[...]
    xc = x.astype(w0_ref.dtype)
    h = jnp.maximum(
        jnp.dot(xc, w0_ref[...], preferred_element_type=jnp.float32) + b0_ref[...], 0.0)
    h = h.astype(w1_ref.dtype)
    h = jnp.maximum(
        jnp.dot(h, w1_ref[...], preferred_element_type=jnp.float32) + b1_ref[...], 0.0)
    o_ref[...] = (x.astype(jnp.float32) + h).astype(o_ref.dtype)


# ------------------------------ tuning helpers --------------------------------


def _vmem_limit_bytes():
    """Scoped-VMEM limit: ~3/4 of physical, capped at 96 MiB (v5e/v6e: 128 MiB
    physical -> 96 MiB; v7x: 64 MiB physical -> 48 MiB). Falls back to 32 MiB."""
    try:
        cap = int(pltpu.get_tpu_info().vmem_capacity_bytes)
        if cap <= 0:
            return 32 * 1024 * 1024
        return max(32 * 1024 * 1024, min(cap * 3 // 4, 96 * 1024 * 1024))
    except Exception:  # noqa: BLE001 - conservative fallback on any query failure
        return 32 * 1024 * 1024


def _pick_tile(m, tile_m, row_align, row_cap, min_steps=8):
    """Row tile: as large as requested/VMEM allows, but deep enough to pipeline.

    Keeps >= `min_steps` grid steps when m allows and prefers an even step count
    (both v7x TensorCores get equal work). m need not divide the tile: the last
    block is handled by Pallas's clipped DMA, so no padding / slicing is needed.
    """
    target = max(row_align, _round_up(int(tile_m), row_align))
    target = min(target, max(row_align, row_cap // row_align * row_align))
    depth_cap = (m // min_steps) // row_align * row_align
    if depth_cap >= row_align:
        tile = min(target, depth_cap)
    else:
        tile = min(target, _round_up(m, row_align))
    tile = max(tile, row_align)
    grid = pl.cdiv(m, tile)
    if grid > 1 and grid % 2 == 1:
        alt = max(row_align, _round_up(pl.cdiv(m, grid + 1), row_align))
        if pl.cdiv(m, alt) % 2 == 0:
            tile, grid = alt, pl.cdiv(m, alt)
    return tile, grid


# --------------------------------- wrapper ------------------------------------


def resnet_block_fc(x, params, *, tile_m=4096, compute_dtype=None,
                    single_buffer_weights=False):
    """ResnetBlockFC forward pass.

    Args:
      x: (batch, n_points, size_in) array; kept in its native dtype in HBM.
      params: dict with w0 (in, inner), b0 (inner,), w1 (inner, out), b1 (out,),
              and ws (in, out) iff size_in != size_out. (PyTorch stores Linear
              weights as (out, in); transpose once when importing.)
      tile_m: target rows per grid step. Clamped so (a) there are >= 8 grid steps
              whenever M allows (even count preferred) and (b) double-buffered row
              tiles + resident weights fit the scoped-VMEM limit. 4096-8192 is fine
              on v5e/v6e's 128 MiB VMEM; v7x's 64 MiB is respected by (b).
      compute_dtype: MXU input dtype for x/weights (e.g. jnp.bfloat16). x is cast
              per-tile inside the kernel; accumulation is always float32. The
              output uses this dtype.
      single_buffer_weights: request pl.Buffered(1) on the grid-invariant weight
              operands (halves their VMEM footprint at production widths).

    Returns:
      (batch, n_points, size_out) array.
    """
    B, N, size_in = x.shape
    size_inner = params["w0"].shape[1]
    size_out = params["w1"].shape[1]
    has_skip_proj = params.get("ws", None) is not None
    assert has_skip_proj == (size_in != size_out), "ws must be present iff in != out"

    M = B * N
    cdtype = jnp.dtype(compute_dtype) if compute_dtype is not None else x.dtype
    out_dtype = cdtype
    x_item = x.dtype.itemsize
    out_item = jnp.dtype(out_dtype).itemsize
    row_align = 16 if (x_item == 2 or out_item == 2) else 8

    # Rows flattened, channels on the lane axis. Row-major reshape: no HBM copy.
    x2 = x.reshape(M, size_in)

    # Weights: tiny one-time casts/pads (prepack outside if calling in a loop).
    # Biases stay f32 (adds happen against the f32 MXU accumulator).
    b1 = params["b1"].reshape(1, size_out).astype(jnp.float32)
    w1 = params["w1"].astype(cdtype)
    if has_skip_proj:
        # Lane-align the fused [W0 | Ws] split: zero-pad W0 columns / b0 / W1 rows
        # up to a 128 multiple so Ws starts on a vreg lane boundary. The padded
        # columns are exact zeros (relu(0)=0 through zero W1 rows): result unchanged.
        split = _round_up(size_inner, 128)
        pad = split - size_inner
        w0 = params["w0"].astype(cdtype)
        if pad:
            w0 = jnp.pad(w0, ((0, 0), (0, pad)))
            w1 = jnp.pad(w1, ((0, pad), (0, 0)))
        w0s = jnp.concatenate([w0, params["ws"].astype(cdtype)], axis=1)
        b0 = jnp.pad(params["b0"].astype(jnp.float32), (0, pad)).reshape(1, split)
        weight_args = (w0s, b0, w1, b1)
        kernel = functools.partial(_resnet_fc_kernel_skipproj, split=split)
        inter_cols = (split + size_out) + split          # f32 pre + hidden per row
        flops = 2 * M * (size_in * (split + size_out) + split * size_out)
    else:
        w0 = params["w0"].astype(cdtype)
        b0 = params["b0"].reshape(1, size_inner).astype(jnp.float32)
        weight_args = (w0, b0, w1, b1)
        kernel = _resnet_fc_kernel_identity
        inter_cols = 2 * size_inner
        flops = 2 * M * (size_in * size_inner + size_inner * size_out)

    # --- VMEM accounting and row-tile selection --------------------------------
    vmem_limit = _vmem_limit_bytes()
    weight_bytes = sum(int(a.size) * a.dtype.itemsize for a in weight_args)
    resident_bytes = weight_bytes * (1 if single_buffer_weights else 2)
    # Double-buffered x and out row tiles + f32 intermediates scale with the tile.
    per_row_bytes = 2 * size_in * x_item + 2 * size_out * out_item + 4 * inter_cols
    row_budget = max(int(vmem_limit * 0.6) - resident_bytes,
                     row_align * per_row_bytes)
    vmem_row_cap = row_budget // per_row_bytes

    tile, grid_m = _pick_tile(M, tile_m, row_align, vmem_row_cap)

    # --- specs ------------------------------------------------------------------
    row_in = pl.BlockSpec((tile, size_in), lambda i: (i, 0))
    row_out = pl.BlockSpec((tile, size_out), lambda i: (i, 0))

    def resident(shape):
        # Grid-invariant operand: constant index_map keeps it VMEM-resident.
        if single_buffer_weights:
            return pl.BlockSpec(shape, lambda i: (0, 0), pipeline_mode=pl.Buffered(1))
        return pl.BlockSpec(shape, lambda i: (0, 0))

    in_specs = [row_in] + [resident(tuple(a.shape)) for a in weight_args]
    args = (x2,) + weight_args

    bytes_accessed = int(M * size_in * x_item + weight_bytes
                         + M * size_out * out_item)

    out2 = pl.pallas_call(
        kernel,
        out_shape=jax.ShapeDtypeStruct((M, size_out), out_dtype),
        grid_spec=pltpu.PrefetchScalarGridSpec(
            num_scalar_prefetch=0,
            grid=(grid_m,),
            in_specs=in_specs,
            out_specs=row_out,
        ),
        compiler_params=pltpu.CompilerParams(
            dimension_semantics=("parallel",),
            vmem_limit_bytes=vmem_limit,
        ),
        cost_estimate=pl.CostEstimate(
            flops=flops, transcendentals=0, bytes_accessed=bytes_accessed),
    )(*args)

    return out2.reshape(B, N, size_out)   # row-major reshape: no HBM copy


# ------------------------------ reference & demo -------------------------------


def init_params(key, size_in, size_inner, size_out, dtype=jnp.float32):
    """Deterministic synthetic init (nn.Linear-like scales; weights stored as (in, out))."""
    k0, k1, k2, k3, k4 = jax.random.split(key, 5)
    scale0 = 1.0 / jnp.sqrt(size_in)
    scale1 = 1.0 / jnp.sqrt(size_inner)
    params = {
        "w0": jax.random.uniform(k0, (size_in, size_inner), dtype, -1, 1) * scale0,
        "b0": jax.random.uniform(k1, (size_inner,), dtype, -1, 1) * scale0,
        "w1": jax.random.uniform(k2, (size_inner, size_out), dtype, -1, 1) * scale1,
        "b1": jax.random.uniform(k3, (size_out,), dtype, -1, 1) * scale1,
    }
    if size_in != size_out:
        # fc_s: Linear(size_in, size_out, bias=False)
        params["ws"] = jax.random.uniform(k4, (size_in, size_out), dtype, -1, 1) * scale0
    return params


def reference_forward(x, params):
    """Pure-JAX reference matching the PyTorch forward of the given module."""
    h = jax.nn.relu(x @ params["w0"] + params["b0"])
    h = jax.nn.relu(h @ params["w1"] + params["b1"])
    x_s = x @ params["ws"] if params.get("ws", None) is not None else x
    return x_s + h


if __name__ == "__main__":
    key = jax.random.PRNGKey(0)
    k_x, k_p, k_x2, k_p2 = jax.random.split(key, 4)

    # --- Test 1: skip projection (size_in != size_out), float32 ------------------
    B, N = 2, 64
    size_in, size_inner, size_out = 32, 32, 64
    x = jax.random.normal(k_x, (B, N, size_in), jnp.float32)
    params = init_params(k_p, size_in, size_inner, size_out)

    out = jax.block_until_ready(resnet_block_fc(x, params))
    ref = reference_forward(x, params)
    assert out.shape == (B, N, size_out), out.shape
    assert jnp.allclose(out, ref, atol=1e-5, rtol=1e-5), \
        float(jnp.max(jnp.abs(out - ref)))

    # --- Test 2: identity skip, row count not divisible by the tile (ragged tail) -
    B2, N2 = 2, 50
    x_b = jax.random.normal(k_x2, (B2, N2, 32), jnp.float32)
    params_b = init_params(k_p2, 32, 32, 32)

    out_b = jax.block_until_ready(resnet_block_fc(x_b, params_b))
    ref_b = reference_forward(x_b, params_b)
    assert out_b.shape == (B2, N2, 32), out_b.shape
    assert jnp.allclose(out_b, ref_b, atol=1e-5, rtol=1e-5), \
        float(jnp.max(jnp.abs(out_b - ref_b)))

    # --- Test 3: bfloat16 compute (f32 accumulation), x stays f32 in HBM ---------
    out_bf16 = jax.block_until_ready(
        resnet_block_fc(x, params, compute_dtype=jnp.bfloat16))
    assert out_bf16.dtype == jnp.dtype(jnp.bfloat16)
    diff = jnp.max(jnp.abs(out_bf16.astype(jnp.float32) - ref))
    assert jnp.allclose(out_bf16.astype(jnp.float32), ref, atol=1e-1, rtol=5e-2), \
        float(diff)

    print("KERNEL_OK")
</pallas_src>

<mosaic_0001>
module attributes {stable_mosaic.version = 11 : i64} {
  func.func @_resnet_fc_kernel_skipproj(%arg0: i32, %arg1: memref<16x32xf32, #tpu.memory_space<vmem>>, %arg2: memref<32x192xf32, #tpu.memory_space<vmem>>, %arg3: memref<1x128xf32, #tpu.memory_space<vmem>>, %arg4: memref<128x64xf32, #tpu.memory_space<vmem>>, %arg5: memref<1x64xf32, #tpu.memory_space<vmem>>, %arg6: memref<16x64xf32, #tpu.memory_space<vmem>>) attributes {dimension_semantics = [#tpu.dimension_semantics<parallel>], iteration_bounds = array<i64: 8>, scalar_prefetch = 0 : i64, scratch_operands = 0 : i64, tpu.core_type = #tpu.core_type<tc>, window_params = [{transform_indices = @transform_0, window_bounds = array<i64: 16, 32>}, {pipeline_mode = #tpu.pipeline_mode<synchronous>, transform_indices = @transform_1, window_bounds = array<i64: 32, 192>}, {pipeline_mode = #tpu.pipeline_mode<synchronous>, transform_indices = @transform_2, window_bounds = array<i64: 1, 128>}, {pipeline_mode = #tpu.pipeline_mode<synchronous>, transform_indices = @transform_3, window_bounds = array<i64: 128, 64>}, {pipeline_mode = #tpu.pipeline_mode<synchronous>, transform_indices = @transform_4, window_bounds = array<i64: 1, 64>}, {transform_indices = @transform_5, window_bounds = array<i64: 16, 64>}]} {
    %c0 = arith.constant 0 : index
    %c0_0 = arith.constant 0 : index
    %0 = vector.load %arg1[%c0, %c0_0] : memref<16x32xf32, #tpu.memory_space<vmem>>, vector<16x32xf32>
    %c0_1 = arith.constant 0 : index
    %c0_2 = arith.constant 0 : index
    %1 = vector.load %arg2[%c0_1, %c0_2] : memref<32x192xf32, #tpu.memory_space<vmem>>, vector<32x192xf32>
    %cst = arith.constant dense<0.000000e+00> : vector<16x192xf32>
    %2 = tpu.matmul %0, %1, %cst {dimension_numbers = #tpu.dot_dimension_numbers<[1], [0], [0], [1], [0, 0, 1, 1], [], []>} : vector<16x32xf32>, vector<32x192xf32>, vector<16x192xf32> -> vector<16x192xf32>
    %3 = vector.extract_strided_slice %2 {offsets = [0, 0], sizes = [16, 128], strides = [1, 1]} : vector<16x192xf32> to vector<16x128xf32>
    %c0_3 = arith.constant 0 : index
    %c0_4 = arith.constant 0 : index
    %4 = vector.load %arg3[%c0_3, %c0_4] : memref<1x128xf32, #tpu.memory_space<vmem>>, vector<1x128xf32>
    %5 = vector.broadcast %4 : vector<1x128xf32> to vector<16x128xf32>
    %6 = arith.addf %3, %5 : vector<16x128xf32>
    %cst_5 = arith.constant 0.000000e+00 : f32
    %7 = vector.broadcast %cst_5 : f32 to vector<16x128xf32>
    %8 = arith.maximumf %6, %7 : vector<16x128xf32>
    %9 = vector.extract_strided_slice %2 {offsets = [0, 128], sizes = [16, 64], strides = [1, 1]} : vector<16x192xf32> to vector<16x64xf32>
    %c0_6 = arith.constant 0 : index
    %c0_7 = arith.constant 0 : index
    %10 = vector.load %arg4[%c0_6, %c0_7] : memref<128x64xf32, #tpu.memory_space<vmem>>, vector<128x64xf32>
    %cst_8 = arith.constant dense<0.000000e+00> : vector<16x64xf32>
    %11 = tpu.matmul %8, %10, %cst_8 {dimension_numbers = #tpu.dot_dimension_numbers<[1], [0], [0], [1], [0, 0, 1, 1], [], []>} : vector<16x128xf32>, vector<128x64xf32>, vector<16x64xf32> -> vector<16x64xf32>
    %c0_9 = arith.constant 0 : index
    %c0_10 = arith.constant 0 : index
    %12 = vector.load %arg5[%c0_9, %c0_10] : memref<1x64xf32, #tpu.memory_space<vmem>>, vector<1x64xf32>
    %13 = vector.broadcast %12 : vector<1x64xf32> to vector<16x64xf32>
    %14 = arith.addf %11, %13 : vector<16x64xf32>
    %cst_11 = arith.constant 0.000000e+00 : f32
    %15 = vector.broadcast %cst_11 : f32 to vector<16x64xf32>
    %16 = arith.maximumf %14, %15 : vector<16x64xf32>
    %17 = arith.addf %9, %16 : vector<16x64xf32>
    %c0_12 = arith.constant 0 : index
    %c0_13 = arith.constant 0 : index
    %18 = vector.load %arg6[%c0_12, %c0_13] : memref<16x64xf32, #tpu.memory_space<vmem>>, vector<16x64xf32>
    tpu.vector_store %arg6[%c0_12, %c0_13], %17 {strides = array<i32>} : memref<16x64xf32, #tpu.memory_space<vmem>>, vector<16x64xf32>,
    return
  }
  func.func @transform_0(%arg0: i32) -> (i32, i32) {
    %c0_i32 = arith.constant 0 : i32
    %c0_i32_0 = arith.constant 0 : i32
    return %arg0, %c0_i32 : i32, i32
  }
  func.func @transform_1(%arg0: i32) -> (i32, i32) {
    %c0_i32 = arith.constant 0 : i32
    %c0_i32_0 = arith.constant 0 : i32
    %c0_i32_1 = arith.constant 0 : i32
    return %c0_i32, %c0_i32_0 : i32, i32
  }
  func.func @transform_2(%arg0: i32) -> (i32, i32) {
    %c0_i32 = arith.constant 0 : i32
    %c0_i32_0 = arith.constant 0 : i32
    %c0_i32_1 = arith.constant 0 : i32
    return %c0_i32, %c0_i32_0 : i32, i32
  }
  func.func @transform_3(%arg0: i32) -> (i32, i32) {
    %c0_i32 = arith.constant 0 : i32
    %c0_i32_0 = arith.constant 0 : i32
    %c0_i32_1 = arith.constant 0 : i32
    return %c0_i32, %c0_i32_0 : i32, i32
  }
  func.func @transform_4(%arg0: i32) -> (i32, i32) {
    %c0_i32 = arith.constant 0 : i32
    %c0_i32_0 = arith.constant 0 : i32
    %c0_i32_1 = arith.constant 0 : i32
    return %c0_i32, %c0_i32_0 : i32, i32
  }
  func.func @transform_5(%arg0: i32) -> (i32, i32) {
    %c0_i32 = arith.constant 0 : i32
    %c0_i32_0 = arith.constant 0 : i32
    return %arg0, %c0_i32 : i32, i32
  }
}

</mosaic_0001>

<llo_original>
// kernel: tpu_custom_call.1
$region0: #{tpu_custom_call.1}
  #allocation0 [shape = 'u32[]', space=smem, size = 0x4, offset = 0x4, fixed_abs, tag = 'smem constant byte address 0x4 - core index']
  #allocation1 [shape = 'u32[72,128]{1,0:T(1,128)}', space=vmem, size = 0x9000, scoped, tag = 'internal scratch']
  %s0 = inlined_call_operand.vmem [shape: f32[128,32], index: 0, kind: input, shape index: {}]
  %s1 = inlined_call_operand.vmem [shape: f32[32,192], index: 1, kind: input, shape index: {}]
  %s2 = inlined_call_operand.vmem [shape: f32[1,128], index: 2, kind: input, shape index: {}]
  %s3 = inlined_call_operand.vmem [shape: f32[128,64], index: 3, kind: input, shape index: {}]
  %s4 = inlined_call_operand.vmem [shape: f32[1,64], index: 4, kind: input, shape index: {}]
  %s5 = inlined_call_operand.vmem [shape: f32[128,64], index: 5, kind: output, shape index: {}]
  %s6 = sld [smem:[#allocation0]]
  $region53: #{tpu_custom_call.1} parent=0
    _
  %s8 = ssub.s32 1, %s6
  %s9 = scalar_select 0, %s8, %s6
  loop: start=0, step=1, limit=10
  $region2: #{tpu_custom_call.1} parent=0 // loop_pre_header
    _
  $region3: #{tpu_custom_call.1} parent=0 // loop_header
    %s11 = sphi 0, %s15
    %p12 = scmp.ge.s32.totalorder %s11, 10
    %s21 = sphi 0, %s23
    %s24 = sphi 0, %s21
    %s25 = sphi 0, %s24
    %s41 = sphi 0, %s25
    %s45 = sphi 0, %s45
    %s47 = sphi 0, %s45
    %s48 = sphi 0, %s47
    %s62 = sphi 0, %s48
    %s66 = sphi 0, %s66
    %s68 = sphi 0, %s66
    %s69 = sphi 0, %s68
    %s83 = sphi 0, %s69
    %s87 = sphi 0, %s87
    %s89 = sphi 0, %s87
    %s90 = sphi 0, %s89
    %s104 = sphi 0, %s90
    %s108 = sphi 0, %s108
    %s110 = sphi 0, %s108
    %s111 = sphi 0, %s110
    %s125 = sphi 0, %s111
    %s131 = sphi 0, %s133
    %s134 = sphi 0, %s131
    %s135 = sphi 0, %s134
    %s151 = sphi 0, %s135
  $region4: #{tpu_custom_call.1} parent=0 // loop_header_branch
    %14 = sbr.rel (%p12) target = $region8
  $region5: #{tpu_custom_call.1} parent=0 // loop_body
    %s16 = ssub.s32 %s11, 1
    %s17 = ssub.s32 %s11, 2
    %s18 = sadd.s32 %s11, 1
    %s19 = ssub.s32 %s11, %s18
    %p20 = scmp.eq.s32.totalorder %s19, 0
    %s22 = sadd.s32 %s21, 1
    %s23 = scalar_select %p20, %s21, %s22
    %p26 = pneg %p20
    %p27 = scmp.eq.s32.totalorder %s11, 7
    %p28 = por %p26, %p27
    %p29 = scmp.ne.s32.totalorder %s21, %s24
    %p30 = scmp.eq.s32.totalorder %s11, 0
    %p31 = por %p29, %p30
    %p32 = scmp.ne.s32.totalorder %s21, %s24
    %p33 = scmp.eq.s32.totalorder %s16, 7
    %p34 = por %p32, %p33
    %p35 = scmp.ne.s32.totalorder %s24, %s25
    %p36 = scmp.eq.s32.totalorder %s16, 0
    %p37 = por %p35, %p36
    %p38 = scmp.ne.s32.totalorder %s24, %s25
    %p39 = scmp.eq.s32.totalorder %s17, 7
    %p40 = por %p38, %p39
    %p42 = scmp.ne.s32.totalorder %s25, %s41
    %p43 = scmp.eq.s32.totalorder %s17, 0
    %p44 = por %p42, %p43
    %s46 = sadd.s32 %s45, 1
    %p49 = scmp.eq.s32.totalorder %s11, 7
    %p50 = scmp.ne.s32.totalorder %s45, %s47
    %p51 = scmp.eq.s32.totalorder %s11, 0
    %p52 = por %p50, %p51
    %p53 = scmp.ne.s32.totalorder %s45, %s47
    %p54 = scmp.eq.s32.totalorder %s16, 7
    %p55 = por %p53, %p54
    %p56 = scmp.ne.s32.totalorder %s47, %s48
    %p57 = scmp.eq.s32.totalorder %s16, 0
    %p58 = por %p56, %p57
    %p59 = scmp.ne.s32.totalorder %s47, %s48
    %p60 = scmp.eq.s32.totalorder %s17, 7
    %p61 = por %p59, %p60
    %p63 = scmp.ne.s32.totalorder %s48, %s62
    %p64 = scmp.eq.s32.totalorder %s17, 0
    %p65 = por %p63, %p64
    %s67 = sadd.s32 %s66, 1
    %p70 = scmp.eq.s32.totalorder %s11, 7
    %p71 = scmp.ne.s32.totalorder %s66, %s68
    %p72 = scmp.eq.s32.totalorder %s11, 0
    %p73 = por %p71, %p72
    %p74 = scmp.ne.s32.totalorder %s66, %s68
    %p75 = scmp.eq.s32.totalorder %s16, 7
    %p76 = por %p74, %p75
    %p77 = scmp.ne.s32.totalorder %s68, %s69
    %p78 = scmp.eq.s32.totalorder %s16, 0
    %p79 = por %p77, %p78
    %p80 = scmp.ne.s32.totalorder %s68, %s69
    %p81 = scmp.eq.s32.totalorder %s17, 7
    %p82 = por %p80, %p81
    %p84 = scmp.ne.s32.totalorder %s69, %s83
    %p85 = scmp.eq.s32.totalorder %s17, 0
    %p86 = por %p84, %p85
    %s88 = sadd.s32 %s87, 1
    %p91 = scmp.eq.s32.totalorder %s11, 7
    %p92 = scmp.ne.s32.totalorder %s87, %s89
    %p93 = scmp.eq.s32.totalorder %s11, 0
    %p94 = por %p92, %p93
    %p95 = scmp.ne.s32.totalorder %s87, %s89
    %p96 = scmp.eq.s32.totalorder %s16, 7
    %p97 = por %p95, %p96
    %p98 = scmp.ne.s32.totalorder %s89, %s90
    %p99 = scmp.eq.s32.totalorder %s16, 0
    %p100 = por %p98, %p99
    %p101 = scmp.ne.s32.totalorder %s89, %s90
    %p102 = scmp.eq.s32.totalorder %s17, 7
    %p103 = por %p101, %p102
    %p105 = scmp.ne.s32.totalorder %s90, %s104
    %p106 = scmp.eq.s32.totalorder %s17, 0
    %p107 = por %p105, %p106
    %s109 = sadd.s32 %s108, 1
    %p112 = scmp.eq.s32.totalorder %s11, 7
    %p113 = scmp.ne.s32.totalorder %s108, %s110
    %p114 = scmp.eq.s32.totalorder %s11, 0
    %p115 = por %p113, %p114
    %p116 = scmp.ne.s32.totalorder %s108, %s110
    %p117 = scmp.eq.s32.totalorder %s16, 7
    %p118 = por %p116, %p117
    %p119 = scmp.ne.s32.totalorder %s110, %s111
    %p120 = scmp.eq.s32.totalorder %s16, 0
    %p121 = por %p119, %p120
    %p122 = scmp.ne.s32.totalorder %s110, %s111
    %p123 = scmp.eq.s32.totalorder %s17, 7
    %p124 = por %p122, %p123
    %p126 = scmp.ne.s32.totalorder %s111, %s125
    %p127 = scmp.eq.s32.totalorder %s17, 0
    %p128 = por %p126, %p127
    %s129 = ssub.s32 %s11, %s18
    %p130 = scmp.eq.s32.totalorder %s129, 0
    %s132 = sadd.s32 %s131, 1
    %s133 = scalar_select %p130, %s131, %s132
    %p136 = pneg %p130
    %p137 = scmp.eq.s32.totalorder %s11, 7
    %p138 = por %p136, %p137
    %p139 = scmp.ne.s32.totalorder %s131, %s134
    %p140 = scmp.eq.s32.totalorder %s11, 0
    %p141 = por %p139, %p140
    %p142 = scmp.ne.s32.totalorder %s131, %s134
    %p143 = scmp.eq.s32.totalorder %s16, 7
    %p144 = por %p142, %p143
    %p145 = scmp.ne.s32.totalorder %s134, %s135
    %p146 = scmp.eq.s32.totalorder %s16, 0
    %p147 = por %p145, %p146
    %p148 = scmp.ne.s32.totalorder %s134, %s135
    %p149 = scmp.eq.s32.totalorder %s17, 7
    %p150 = por %p148, %p149
    %p152 = scmp.ne.s32.totalorder %s135, %s151
    %p153 = scmp.eq.s32.totalorder %s17, 0
    %p154 = por %p152, %p153
    %p155 = scmp.le.s32.totalorder 1, %s11
    %p156 = scmp.lt.s32.totalorder %s11, 9
    %p157 = pnand %p155, %p156
    %p158 = pneg %p157
    // Predicated region
    $region9: #{tpu_custom_call.1} parent=5 // pred_check
      _
    $region10: #{tpu_custom_call.1} parent=5 // pred_check_branch
      %160 = sbr.rel (%p157) target = $region12
    $region11: #{tpu_custom_call.1} parent=5 // pred_region
      %s161 = ssub.s32 %s11, 1
      // Predicated region
      $region13: #{tpu_custom_call.1} parent=11 // pred_check
        %p162 = pneg %p58
      $region14: #{tpu_custom_call.1} parent=11 // pred_check_branch
        %164 = sbr.rel (%p162) target = $region16
      $region15: #{tpu_custom_call.1} parent=11 // pred_region
        _
      $region16: #{tpu_custom_call.1} parent=11 // pred_fallthru
        _
      // Predicated region
      $region17: #{tpu_custom_call.1} parent=11 // pred_check
        %p165 = pneg %p79
      $region18: #{tpu_custom_call.1} parent=11 // pred_check_branch
        %167 = sbr.rel (%p165) target = $region20
      $region19: #{tpu_custom_call.1} parent=11 // pred_region
        _
      $region20: #{tpu_custom_call.1} parent=11 // pred_fallthru
        _
      // Predicated region
      $region21: #{tpu_custom_call.1} parent=11 // pred_check
        %p168 = pneg %p100
      $region22: #{tpu_custom_call.1} parent=11 // pred_check_branch
        %170 = sbr.rel (%p168) target = $region24
      $region23: #{tpu_custom_call.1} parent=11 // pred_region
        _
      $region24: #{tpu_custom_call.1} parent=11 // pred_fallthru
        _
      // Predicated region
      $region25: #{tpu_custom_call.1} parent=11 // pred_check
        %p171 = pneg %p121
      $region26: #{tpu_custom_call.1} parent=11 // pred_check_branch
        %173 = sbr.rel (%p171) target = $region28
      $region27: #{tpu_custom_call.1} parent=11 // pred_region
        _
      $region28: #{tpu_custom_call.1} parent=11 // pred_fallthru
        _
    $region12: #{tpu_custom_call.1} parent=5 // pred_fallthru
      _
    %p174 = scmp.lt.s32.totalorder %s11, 8
    // Predicated region
    $region29: #{tpu_custom_call.1} parent=5 // pred_check
      %p175 = pneg %p174
    $region30: #{tpu_custom_call.1} parent=5 // pred_check_branch
      %177 = sbr.rel (%p175) target = $region32
    $region31: #{tpu_custom_call.1} parent=5 // pred_region
      // Predicated region
      $region33: #{tpu_custom_call.1} parent=31 // pred_check
        %p178 = pneg %p31
      $region34: #{tpu_custom_call.1} parent=31 // pred_check_branch
        %180 = sbr.rel (%p178) target = $region36
      $region35: #{tpu_custom_call.1} parent=31 // pred_region
        %s181 = smul.u32 2, %s11
        %p182 = scmp.lt.s32.totalorder %s181, 15
        %s183 = scalar_select %p182, %s181, 15
        %s184 = smul.addr %s183, 8
        %s185 = scalar_lea.vmem %s0, %s184
        %s186 = smul.u32 2, %s11
      $region36: #{tpu_custom_call.1} parent=31 // pred_fallthru
        _
    $region32: #{tpu_custom_call.1} parent=5 // pred_fallthru
      _
    %p187 = scmp.le.s32.totalorder 1, %s11
    %p188 = scmp.lt.s32.totalorder %s11, 9
    %p189 = pnand %p187, %p188
    %p190 = pneg %p189
    // Predicated region
    $region37: #{tpu_custom_call.1} parent=5 // pred_check
      _
    $region38: #{tpu_custom_call.1} parent=5 // pred_check_branch
      %192 = sbr.rel (%p189) target = $region40
    $region39: #{tpu_custom_call.1} parent=5 // pred_region
      %s193 = ssub.s32 %s11, 1
      %s194 = smul.u32 2, %s16
      %p195 = scmp.lt.s32.totalorder %s194, 15
      %s196 = scalar_select %p195, %s194, 15
      %s197 = smul.addr %s196, 8
      %s198 = scalar_lea.vmem %s0, %s197
      %p199 = pneg %p37
      %p200 = pneg %p34
      %p201 = pneg %p58
      %p202 = pneg %p55
      %p203 = pneg %p79
      %p204 = pneg %p76
      %p205 = pneg %p100
      %p206 = pneg %p97
      %p207 = pneg %p121
      %p208 = pneg %p118
      %p209 = pneg %p147
      %p210 = pneg %p144
      %s211 = smul.u32 2, %s16
      %p212 = scmp.lt.s32.totalorder %s211, 15
      %s213 = scalar_select %p212, %s211, 15
      %s214 = smul.addr %s213, 8
      %s215 = scalar_lea.vmem %s5, %s214
      %s216 = smul.u32 2, %s16
      %p217 = scmp.lt.s32.totalorder %s216, 15
      %s218 = scalar_select %p217, %s216, 15
      %s219 = smul.addr %s218, 8
      %s220 = scalar_lea.vmem %s0, %s219
      %s221 = smul.u32 2, %s16
      %s222 = smul.u32 2, %s16
      %p223 = scmp.lt.s32.totalorder %s222, 15
      %s224 = scalar_select %p223, %s222, 15
      %s225 = smul.addr %s224, 8
      %s226 = scalar_lea.vmem %s5, %s225
      %s227 = smul.u32 2, %s16
      %v228 = vld [vmem:[%s220] sm:$0xff]
      %v229 = vld [vmem:[%s220 + $0x8] sm:$0xff]
      %v230 = vld [vmem:[%s1] sm:$0xff]
      %v231 = vld [vmem:[%s1 + $0x8] sm:$0xff]
      %v232 = vld [vmem:[%s1 + $0x10] sm:$0xff]
      %v233 = vld [vmem:[%s1 + $0x18] sm:$0xff]
      %v234 = vld [vmem:[%s1 + $0x20] sm:$0xff]
      %v235 = vld [vmem:[%s1 + $0x28] sm:$0xff]
      %v236 = vld [vmem:[%s1 + $0x30] sm:$0xff]
      %v237 = vld [vmem:[%s1 + $0x38] sm:$0xff]
      %vm238 = vcmask 261120
      %v240 = vsel %vm238, %v228, 0
      %v243 = vsel %vm238, %v229, 0
      %245 = vmatpush.msra.mxu0 0.0
      %246 = vmatpush.msra.mxu0 0.0
      %247 = vmatpush.msra.mxu0 0.0
      %248 = vmatpush.msra.mxu0 0.0
      %249 = vmatpush.msra.mxu0 0.0
      %250 = vmatpush.msra.mxu0 0.0
      %251 = vmatpush.msra.mxu0 0.0
      %252 = vmatpush.msra.mxu0 0.0
      %253 = vmatpush.msra.mxu0 0.0
      %254 = vmatpush.msra.mxu0 0.0
      %255 = vmatpush.msra.mxu0 0.0
      %256 = vmatpush.msra.mxu0 0.0
      %257 = vmatpush.msra.mxu0 %v236
      %258 = vmatpush.msra.mxu0 %v234
      %259 = vmatpush.msra.mxu0 %v232
      %260 = vmatpush.msra.mxu0 %v230
      %261 = vmatmul.f32.gmra.mxu0 %v240
      %v262 = vpop.f32.mrf.mxu0
      %v263 = vadd.f32 0.0, %v262
      %264 = vmatmul.f32.gmra.mxu0 %v243
      %v265 = vpop.f32.mrf.mxu0
      %v266 = vadd.f32 0.0, %v265
      %267 = vdwg.mxu0
      %268 = vmatpush.msra.mxu0 0.0
      %269 = vmatpush.msra.mxu0 0.0
      %270 = vmatpush.msra.mxu0 0.0
      %271 = vmatpush.msra.mxu0 0.0
      %272 = vmatpush.msra.mxu0 0.0
      %273 = vmatpush.msra.mxu0 0.0
      %274 = vmatpush.msra.mxu0 0.0
      %275 = vmatpush.msra.mxu0 0.0
      %276 = vmatpush.msra.mxu0 0.0
      %277 = vmatpush.msra.mxu0 0.0
      %278 = vmatpush.msra.mxu0 0.0
      %279 = vmatpush.msra.mxu0 0.0
      %280 = vmatpush.msra.mxu0 %v237
      %281 = vmatpush.msra.mxu0 %v235
      %282 = vmatpush.msra.mxu0 %v233
      %283 = vmatpush.msra.mxu0 %v231
      %284 = vmatmul.f32.gmra.mxu0 %v240
      %v285 = vpop.f32.mrf.mxu0
      %v286 = vadd.f32 0.0, %v285
      %287 = vmatmul.f32.gmra.mxu0 %v243
      %v288 = vpop.f32.mrf.mxu0
      %v289 = vadd.f32 0.0, %v288
      %290 = vdwg.mxu0
      %v291 = vld [vmem:[%s2] sm:$0x1]
      %v293 = vperm.slane %v291, 0
      %v295 = vadd.f32 %v263, %v293
      %v296 = vadd.f32 %v266, %v293
      %v297 = vmax.f32 %v295, 0.0
      %v298 = vmax.f32 %v296, 0.0
      %v299 = vld [vmem:[%s3] sm:$0xff]
      %v300 = vld [vmem:[%s3 + $0x8] sm:$0xff]
      %v301 = vld [vmem:[%s3 + $0x10] sm:$0xff]
      %v302 = vld [vmem:[%s3 + $0x18] sm:$0xff]
      %v303 = vld [vmem:[%s3 + $0x20] sm:$0xff]
      %v304 = vld [vmem:[%s3 + $0x28] sm:$0xff]
      %v305 = vld [vmem:[%s3 + $0x30] sm:$0xff]
      %v306 = vld [vmem:[%s3 + $0x38] sm:$0xff]
      %v307 = vld [vmem:[%s3 + $0x40] sm:$0xff]
      %v308 = vld [vmem:[%s3 + $0x48] sm:$0xff]
      %v309 = vld [vmem:[%s3 + $0x50] sm:$0xff]
      %v310 = vld [vmem:[%s3 + $0x58] sm:$0xff]
      %v311 = vld [vmem:[%s3 + $0x60] sm:$0xff]
      %v312 = vld [vmem:[%s3 + $0x68] sm:$0xff]
      %v313 = vld [vmem:[%s3 + $0x70] sm:$0xff]
      %v314 = vld [vmem:[%s3 + $0x78] sm:$0xff]
      %v315 = vld [vmem:[%s4] sm:$0x1]
      %v317 = vperm.slane %v315, 0
      %319 = vmatpush.msra.mxu0 %v314
      %320 = vmatpush.msra.mxu0 %v313
      %321 = vmatpush.msra.mxu0 %v312
      %322 = vmatpush.msra.mxu0 %v311
      %323 = vmatpush.msra.mxu0 %v310
      %324 = vmatpush.msra.mxu0 %v309
      %325 = vmatpush.msra.mxu0 %v308
      %326 = vmatpush.msra.mxu0 %v307
      %327 = vmatpush.msra.mxu0 %v306
      %328 = vmatpush.msra.mxu0 %v305
      %329 = vmatpush.msra.mxu0 %v304
      %330 = vmatpush.msra.mxu0 %v303
      %331 = vmatpush.msra.mxu0 %v302
      %332 = vmatpush.msra.mxu0 %v301
      %333 = vmatpush.msra.mxu0 %v300
      %334 = vmatpush.msra.mxu0 %v299
      %335 = vmatmul.f32.gmra.mxu0 %v297
      %v336 = vpop.f32.mrf.mxu0
      %v337 = vadd.f32 %v317, %v336
      %338 = vmatmul.f32.gmra.mxu0 %v298
      %v339 = vpop.f32.mrf.mxu0
      %v340 = vadd.f32 %v317, %v339
      %341 = vdwg.mxu0
      %v342 = vmax.f32 %v337, 0.0
      %v343 = vmax.f32 %v340, 0.0
      %v344 = vadd.f32 %v286, %v342
      %v345 = vadd.f32 %v289, %v343
      %vm346 = vcmask 523264
      %347 = vst.msk [vmem:[%s226] sm:$0xff] %vm346, %v344
      %348 = vst.msk [vmem:[%s226 + $0x8] sm:$0xff] %vm346, %v345
      %s349 = smul.u32 2, %s16
      %p350 = scmp.lt.s32.totalorder %s349, 15
      %s351 = scalar_select %p350, %s349, 15
      %s352 = smul.addr %s351, 8
      %s353 = scalar_lea.vmem %s5, %s352
      // Predicated region
      $region41: #{tpu_custom_call.1} parent=39 // pred_check
        %p354 = pneg %p144
      $region42: #{tpu_custom_call.1} parent=39 // pred_check_branch
        %356 = sbr.rel (%p354) target = $region44
      $region43: #{tpu_custom_call.1} parent=39 // pred_region
        %s357 = smul.u32 2, %s16
      $region44: #{tpu_custom_call.1} parent=39 // pred_fallthru
        _
    $region40: #{tpu_custom_call.1} parent=5 // pred_fallthru
      _
    %p358 = scmp.le.s32.totalorder 2, %s11
    // Predicated region
    $region45: #{tpu_custom_call.1} parent=5 // pred_check
      %p359 = pneg %p358
    $region46: #{tpu_custom_call.1} parent=5 // pred_check_branch
      %361 = sbr.rel (%p359) target = $region48
    $region47: #{tpu_custom_call.1} parent=5 // pred_region
      %s362 = ssub.s32 %s11, 2
      // Predicated region
      $region49: #{tpu_custom_call.1} parent=47 // pred_check
        %p363 = pneg %p150
      $region50: #{tpu_custom_call.1} parent=47 // pred_check_branch
        %365 = sbr.rel (%p363) target = $region52
      $region51: #{tpu_custom_call.1} parent=47 // pred_region
        %s366 = smul.u32 2, %s17
        %p367 = scmp.lt.s32.totalorder %s366, 15
        %s368 = scalar_select %p367, %s366, 15
        %s369 = smul.addr %s368, 8
        %s370 = scalar_lea.vmem %s5, %s369
      $region52: #{tpu_custom_call.1} parent=47 // pred_fallthru
        _
    $region48: #{tpu_custom_call.1} parent=5 // pred_fallthru
      _
  $region6: #{tpu_custom_call.1} parent=0 // loop_footer
    %s15 = sadd.s32 1, %s11
  $region7: #{tpu_custom_call.1} parent=0 // loop_footer_branch
    %10 = sbr.rel target = $region3
  $region8: #{tpu_custom_call.1} parent=0 // loop_exit
    _

</llo_original>
